<compile_context>
chip_gen: v5e
topology: v5e:2x2
jax: 0.10.0
libtpu: 0.0.40
codegen_flags: <defaults>
</compile_context>

<pallas_src>
import jax
import jax.numpy as jnp
from jax.experimental import pallas as pl
from jax.experimental.pallas import tpu as pltpu


# --------------------------------------------------------------------------
# Config (the "args" of the PyTorch module), small synthetic sizes.
# --------------------------------------------------------------------------
CFG = dict(
    n_agents=3,
    n_enemies=4,
    n_actions=6,                 # unused by forward, kept for fidelity
    state_ally_feats_size=5,
    state_enemy_feats_size=6,
    state_last_action=False,     # module does nothing with it (pass)
    state_timestep_number=True,
    output_dim=32,
)
CFG["state_component"] = [
    CFG["n_agents"] * CFG["state_ally_feats_size"],      # allies   (component 0)
    CFG["n_enemies"] * CFG["state_enemy_feats_size"],    # enemies  (component 1)
    1,                                                   # timestep (last component)
]

TILE_N = 512      # rows per grid step (sweep 512/1024/2048 at scale)
LANE = 128        # lane-dense output padding


def _round_up(x, m):
    return ((x + m - 1) // m) * m


# --------------------------------------------------------------------------
# Pallas kernel: one fused (TILE_N, state_dim) @ (state_dim, D_pad) matmul + bias.
# --------------------------------------------------------------------------
def _input_layer_kernel(x_ref, w_ref, b_ref, o_ref):
    acc = jnp.dot(x_ref[...], w_ref[...], preferred_element_type=jnp.float32)
    o_ref[...] = (acc + b_ref[...]).astype(o_ref.dtype)


# --------------------------------------------------------------------------
# Wrapper: weight stacking / padding done once at trace time, hot path in kernel.
# --------------------------------------------------------------------------
def api_input_layer_forward(states, params, cfg, *, tile_n=TILE_N,
                            compute_dtype=jnp.float32):
    n_agents = cfg["n_agents"]
    n_enemies = cfg["n_enemies"]
    d = cfg["output_dim"]
    d_pad = _round_up(d, LANE)
    state_component = cfg["state_component"]
    state_dim = sum(state_component)

    # ---- Build the stacked weight whose row layout matches the flat state. ----
    # component 0 -> allies (W_ally repeated n_agents times)
    # component 1 -> enemies (W_enemy repeated n_enemies times)
    # last component -> timestep (if enabled)
    # any other component -> ignored by the module (zero rows)
    blocks = []
    n_comp = len(state_component)
    for ci, c in enumerate(state_component):
        if ci == 0:
            blocks.append(jnp.tile(params["w_ally"], (n_agents, 1)))
        elif ci == 1:
            blocks.append(jnp.tile(params["w_enemy"], (n_enemies, 1)))
        elif cfg["state_timestep_number"] and ci == n_comp - 1:
            blocks.append(params["w_ts"])
        else:
            blocks.append(jnp.zeros((c, d), jnp.float32))
    w_stacked = jnp.concatenate(blocks, axis=0)                    # (state_dim, d)
    assert w_stacked.shape[0] == state_dim

    bias = (jnp.float32(n_agents) * params["b_ally"]
            + jnp.float32(n_enemies) * params["b_enemy"])
    if cfg["state_timestep_number"]:
        bias = bias + params["b_ts"]
    bias = bias.reshape(1, d)

    # Pad output dimension to a lane-dense (multiple-of-128) slab: unmasked vst
    # in the kernel and a full-width MXU result tile. Zero columns cost nothing.
    w_stacked = jnp.pad(w_stacked, ((0, 0), (0, d_pad - d))).astype(compute_dtype)
    bias = jnp.pad(bias, ((0, 0), (0, d_pad - d))).astype(jnp.float32)

    # ---- Flat state rows, single input stream. ----
    x = states.reshape(-1, states.shape[-1]).astype(compute_dtype)
    assert x.shape[-1] == state_dim
    n = x.shape[0]

    # Row tiling: clamp tile to the (8-aligned) problem size, zero-pad ragged N.
    tile = min(tile_n, _round_up(n, 8))
    n_pad = _round_up(n, tile)
    if n_pad != n:
        x = jnp.pad(x, ((0, n_pad - n), (0, 0)))

    out = pl.pallas_call(
        _input_layer_kernel,
        out_shape=jax.ShapeDtypeStruct((n_pad, d_pad), jnp.float32),
        grid_spec=pltpu.PrefetchScalarGridSpec(
            num_scalar_prefetch=0,
            grid=(n_pad // tile,),
            in_specs=[
                pl.BlockSpec((tile, state_dim), lambda i: (i, 0)),      # states
                pl.BlockSpec((state_dim, d_pad), lambda i: (0, 0)),     # resident W
                pl.BlockSpec((1, d_pad), lambda i: (0, 0)),             # resident b
            ],
            out_specs=pl.BlockSpec((tile, d_pad), lambda i: (i, 0)),
        ),
        compiler_params=pltpu.CompilerParams(
            dimension_semantics=("parallel",)),
    )(x, w_stacked, bias)

    return out[:n, :d]


# --------------------------------------------------------------------------
# Pure-JAX reference (mirrors the PyTorch forward exactly).
# --------------------------------------------------------------------------
def reference_forward(states, params, cfg):
    comps, idx = [], 0
    for c in cfg["state_component"]:
        comps.append(states[..., idx:idx + c])
        idx += c
    enemy = comps[1].reshape(-1, cfg["n_enemies"], cfg["state_enemy_feats_size"])
    enemy_emb = (enemy @ params["w_enemy"] + params["b_enemy"]).sum(axis=1)
    ally = comps[0].reshape(-1, cfg["n_agents"], cfg["state_ally_feats_size"])
    ally_emb = (ally @ params["w_ally"] + params["b_ally"]).sum(axis=1)
    out = enemy_emb + ally_emb
    if cfg["state_timestep_number"]:
        ts = comps[-1].reshape(-1, 1)
        out = out + (ts @ params["w_ts"] + params["b_ts"])
    return out


# --------------------------------------------------------------------------
# Deterministic parameter init + example run.
# --------------------------------------------------------------------------
def init_params(key, cfg):
    d = cfg["output_dim"]
    fa = cfg["state_ally_feats_size"]
    fe = cfg["state_enemy_feats_size"]
    ks = jax.random.split(key, 6)
    scale = 0.1
    return dict(
        w_ally=scale * jax.random.normal(ks[0], (fa, d), jnp.float32),
        b_ally=scale * jax.random.normal(ks[1], (1, d), jnp.float32),
        w_enemy=scale * jax.random.normal(ks[2], (fe, d), jnp.float32),
        b_enemy=scale * jax.random.normal(ks[3], (1, d), jnp.float32),
        w_ts=scale * jax.random.normal(ks[4], (1, d), jnp.float32),
        b_ts=scale * jax.random.normal(ks[5], (1, d), jnp.float32),
    )


if __name__ == "__main__":
    key = jax.random.PRNGKey(0)
    k_params, k_states, k_states2 = jax.random.split(key, 3)

    params = init_params(k_params, CFG)
    state_dim = sum(CFG["state_component"])  # 15 + 24 + 1 = 40

    # Case 1: batch=2, seq=8 -> N=16 rows.
    batch, seq = 2, 8
    states = jax.random.normal(k_states, (batch, seq, state_dim), jnp.float32)
    out = jax.block_until_ready(api_input_layer_forward(states, params, CFG))
    ref = reference_forward(states, params, CFG)
    assert out.shape == (batch * seq, CFG["output_dim"]), out.shape
    assert jnp.allclose(out, ref, atol=1e-4, rtol=1e-4), "mismatch vs reference (case 1)"

    # Case 2: ragged row count (N=15) exercises the zero-row-padding path.
    states2 = jax.random.normal(k_states2, (3, 5, state_dim), jnp.float32)
    out2 = jax.block_until_ready(api_input_layer_forward(states2, params, CFG))
    ref2 = reference_forward(states2, params, CFG)
    assert out2.shape == (15, CFG["output_dim"]), out2.shape
    assert jnp.allclose(out2, ref2, atol=1e-4, rtol=1e-4), "mismatch vs reference (case 2)"

    print("KERNEL_OK")
</pallas_src>

<mosaic_0001>
module attributes {stable_mosaic.version = 11 : i64} {
  func.func @_input_layer_kernel(%arg0: i32, %arg1: memref<16x40xf32, #tpu.memory_space<vmem>>, %arg2: memref<40x128xf32, #tpu.memory_space<vmem>>, %arg3: memref<1x128xf32, #tpu.memory_space<vmem>>, %arg4: memref<16x128xf32, #tpu.memory_space<vmem>>) attributes {dimension_semantics = [#tpu.dimension_semantics<parallel>], iteration_bounds = array<i64: 1>, scalar_prefetch = 0 : i64, scratch_operands = 0 : i64, tpu.core_type = #tpu.core_type<tc>, window_params = [{transform_indices = @transform_0, window_bounds = array<i64: 16, 40>}, {pipeline_mode = #tpu.pipeline_mode<synchronous>, transform_indices = @transform_1, window_bounds = array<i64: 40, 128>}, {pipeline_mode = #tpu.pipeline_mode<synchronous>, transform_indices = @transform_2, window_bounds = array<i64: 1, 128>}, {transform_indices = @transform_3, window_bounds = array<i64: 16, 128>}]} {
    %c0 = arith.constant 0 : index
    %c0_0 = arith.constant 0 : index
    %0 = vector.load %arg1[%c0, %c0_0] : memref<16x40xf32, #tpu.memory_space<vmem>>, vector<16x40xf32>
    %c0_1 = arith.constant 0 : index
    %c0_2 = arith.constant 0 : index
    %1 = vector.load %arg2[%c0_1, %c0_2] : memref<40x128xf32, #tpu.memory_space<vmem>>, vector<40x128xf32>
    %cst = arith.constant dense<0.000000e+00> : vector<16x128xf32>
    %2 = tpu.matmul %0, %1, %cst {dimension_numbers = #tpu.dot_dimension_numbers<[1], [0], [0], [1], [0, 0, 1, 1], [], []>} : vector<16x40xf32>, vector<40x128xf32>, vector<16x128xf32> -> vector<16x128xf32>
    %c0_3 = arith.constant 0 : index
    %c0_4 = arith.constant 0 : index
    %3 = vector.load %arg3[%c0_3, %c0_4] : memref<1x128xf32, #tpu.memory_space<vmem>>, vector<1x128xf32>
    %4 = vector.broadcast %3 : vector<1x128xf32> to vector<16x128xf32>
    %5 = arith.addf %2, %4 : vector<16x128xf32>
    %c0_5 = arith.constant 0 : index
    %c0_6 = arith.constant 0 : index
    %6 = vector.load %arg4[%c0_5, %c0_6] : memref<16x128xf32, #tpu.memory_space<vmem>>, vector<16x128xf32>
    tpu.vector_store %arg4[%c0_5, %c0_6], %5 {strides = array<i32>} : memref<16x128xf32, #tpu.memory_space<vmem>>, vector<16x128xf32>,
    return
  }
  func.func @transform_0(%arg0: i32) -> (i32, i32) {
    %c0_i32 = arith.constant 0 : i32
    %c0_i32_0 = arith.constant 0 : i32
    return %arg0, %c0_i32 : i32, i32
  }
  func.func @transform_1(%arg0: i32) -> (i32, i32) {
    %c0_i32 = arith.constant 0 : i32
    %c0_i32_0 = arith.constant 0 : i32
    %c0_i32_1 = arith.constant 0 : i32
    return %c0_i32, %c0_i32_0 : i32, i32
  }
  func.func @transform_2(%arg0: i32) -> (i32, i32) {
    %c0_i32 = arith.constant 0 : i32
    %c0_i32_0 = arith.constant 0 : i32
    %c0_i32_1 = arith.constant 0 : i32
    return %c0_i32, %c0_i32_0 : i32, i32
  }
  func.func @transform_3(%arg0: i32) -> (i32, i32) {
    %c0_i32 = arith.constant 0 : i32
    %c0_i32_0 = arith.constant 0 : i32
    return %arg0, %c0_i32 : i32, i32
  }
}

</mosaic_0001>

<llo_original>
// kernel: tpu_custom_call.1
$region0: #{tpu_custom_call.1}
  #allocation0 [shape = 'u32[]', space=smem, size = 0x4, offset = 0x4, fixed_abs, tag = 'smem constant byte address 0x4 - core index']
  #allocation1 [shape = 'u32[72,128]{1,0:T(1,128)}', space=vmem, size = 0x9000, scoped, tag = 'internal scratch']
  %s0 = inlined_call_operand.hbm [shape: f32[16,40], index: 0, kind: input, shape index: {}]
  %s1 = inlined_call_operand.hbm [shape: f32[40,128], index: 1, kind: input, shape index: {}]
  %s2 = inlined_call_operand.vmem [shape: f32[1,128], index: 2, kind: input, shape index: {}]
  %s3 = inlined_call_operand.hbm [shape: f32[16,128], index: 3, kind: output, shape index: {}]
  %s4 = sld [smem:[#allocation0]]
  $region30: #{tpu_custom_call.1} parent=0
    _
  %s6 = ssub.s32 1, %s4
  %s7 = scalar_select 0, %s6, %s4
  $region1: #{tpu_custom_call.1} parent=0
    #allocation2 [shape = 'u8[8192]{0}', space=vmem, size = 0x2000, scoped, tag = 'input window, operand 0, single buffered']
    #allocation3 [shape = 's32[1]{0}', space=sflag, size = 0x4, scoped, tag = 'scoped memory for tpu_custom_call.1']
    #allocation4 [shape = 's32[1]{0}', space=sflag, size = 0x4, scoped, tag = 'scoped memory for tpu_custom_call.1']
    #allocation5 [shape = 'u8[20480]{0}', space=vmem, size = 0x5000, scoped, tag = 'input window, operand 1, single buffered']
    #allocation6 [shape = 's32[1]{0}', space=sflag, size = 0x4, scoped, tag = 'scoped memory for tpu_custom_call.1']
    #allocation7 [shape = 'u8[8192]{0}', space=vmem, size = 0x2000, scoped, tag = 'output window, operand 0, single buffered']
    %8 = vsyncpa [#allocation3], 0
    %9 = vsyncpa [#allocation6], 0
    %10 = vsyncpa [#allocation4], 0
    // Predicated region
    $region2: #{tpu_custom_call.1} parent=1 // pred_check
      _
    $region3: #{tpu_custom_call.1} parent=1 // pred_check_branch
      %12 = sbr.rel (0) target = $region5
    $region4: #{tpu_custom_call.1} parent=1 // pred_region
      %14 = vsyncadd [#allocation3], 0
      %s15 = sshll.u32 %s0, 4
      %s16 = int_to_ptr.hbm [resolvable:$true] %s15
      %s17 = sshll.u32 [#allocation2], 4
      %s18 = int_to_ptr.vmem [resolvable:$true] %s17
      %23 = dma.hbm_to_vmem [thread:$0]  %s16, 256, %s18, [#allocation3], 128, 128, 8
    $region5: #{tpu_custom_call.1} parent=1 // pred_fallthru
      _
    // Predicated region
    $region6: #{tpu_custom_call.1} parent=1 // pred_check
      _
    $region7: #{tpu_custom_call.1} parent=1 // pred_check_branch
      %25 = sbr.rel (0) target = $region9
    $region8: #{tpu_custom_call.1} parent=1 // pred_region
      %27 = vsyncadd [#allocation6], 0
      %s28 = sshll.u32 %s1, 4
      %s29 = int_to_ptr.hbm [resolvable:$true] %s28
      %s30 = sshll.u32 [#allocation5], 4
      %s31 = int_to_ptr.vmem [resolvable:$true] %s30
      %36 = dma.hbm_to_vmem [thread:$0]  %s29, 640, %s31, [#allocation6], 128, 128, 8
    $region9: #{tpu_custom_call.1} parent=1 // pred_fallthru
      _
    // Predicated region
    $region10: #{tpu_custom_call.1} parent=1 // pred_check
      _
    $region11: #{tpu_custom_call.1} parent=1 // pred_check_branch
      %38 = sbr.rel (0) target = $region13
    $region12: #{tpu_custom_call.1} parent=1 // pred_region
      _
    $region13: #{tpu_custom_call.1} parent=1 // pred_fallthru
      _
    // Predicated region
    $region14: #{tpu_custom_call.1} parent=1 // pred_check
      _
    $region15: #{tpu_custom_call.1} parent=1 // pred_check_branch
      %40 = sbr.rel (0) target = $region17
    $region16: #{tpu_custom_call.1} parent=1 // pred_region
      %42 = dma.done [#allocation3], 256
    $region17: #{tpu_custom_call.1} parent=1 // pred_fallthru
      _
    // Predicated region
    $region18: #{tpu_custom_call.1} parent=1 // pred_check
      _
    $region19: #{tpu_custom_call.1} parent=1 // pred_check_branch
      %44 = sbr.rel (0) target = $region21
    $region20: #{tpu_custom_call.1} parent=1 // pred_region
      %46 = dma.done [#allocation6], 640
    $region21: #{tpu_custom_call.1} parent=1 // pred_fallthru
      _
    %v47 = vld [vmem:[#allocation2] sm:$0xff]
    %v48 = vld [vmem:[#allocation2 + $0x8] sm:$0xff]
    %v49 = vld [vmem:[#allocation5] sm:$0xff]
    %v50 = vld [vmem:[#allocation5 + $0x8] sm:$0xff]
    %v51 = vld [vmem:[#allocation5 + $0x10] sm:$0xff]
    %v52 = vld [vmem:[#allocation5 + $0x18] sm:$0xff]
    %v53 = vld [vmem:[#allocation5 + $0x20] sm:$0xff]
    %v54 = vld [vmem:[%s2] sm:$0x1]
    %v56 = vperm.slane %v54, 0
    %vm58 = vcmask 326656
    %v60 = vsel %vm58, %v47, 0
    %v63 = vsel %vm58, %v48, 0
    %65 = vmatpush.msra.mxu0 0.0
    %66 = vmatpush.msra.mxu0 0.0
    %67 = vmatpush.msra.mxu0 0.0
    %68 = vmatpush.msra.mxu0 0.0
    %69 = vmatpush.msra.mxu0 0.0
    %70 = vmatpush.msra.mxu0 0.0
    %71 = vmatpush.msra.mxu0 0.0
    %72 = vmatpush.msra.mxu0 0.0
    %73 = vmatpush.msra.mxu0 0.0
    %74 = vmatpush.msra.mxu0 0.0
    %75 = vmatpush.msra.mxu0 0.0
    %76 = vmatpush.msra.mxu0 %v53
    %77 = vmatpush.msra.mxu0 %v52
    %78 = vmatpush.msra.mxu0 %v51
    %79 = vmatpush.msra.mxu0 %v50
    %80 = vmatpush.msra.mxu0 %v49
    %81 = vmatmul.f32.gmra.mxu0 %v60
    %v82 = vpop.f32.mrf.mxu0
    %v83 = vadd.f32 %v56, %v82
    %84 = vmatmul.f32.gmra.mxu0 %v63
    %v85 = vpop.f32.mrf.mxu0
    %v86 = vadd.f32 %v56, %v85
    %87 = vdwg.mxu0
    %88 = vst [vmem:[#allocation7] sm:$0xff] %v83
    %89 = vst [vmem:[#allocation7 + $0x8] sm:$0xff] %v86
    // Predicated region
    $region22: #{tpu_custom_call.1} parent=1 // pred_check
      _
    $region23: #{tpu_custom_call.1} parent=1 // pred_check_branch
      %91 = sbr.rel (0) target = $region25
    $region24: #{tpu_custom_call.1} parent=1 // pred_region
      %93 = vsyncadd [#allocation4], 0
      %s94 = sshll.u32 [#allocation7], 4
      %s95 = int_to_ptr.vmem [resolvable:$true] %s94
      %s96 = sshll.u32 %s3, 4
      %s97 = int_to_ptr.hbm [resolvable:$true] %s96
      %102 = dma.vmem_to_hbm [thread:$0]  %s95, 256, %s97, [#allocation4], 128, 128, 8
    $region25: #{tpu_custom_call.1} parent=1 // pred_fallthru
      _
    // Predicated region
    $region26: #{tpu_custom_call.1} parent=1 // pred_check
      _
    $region27: #{tpu_custom_call.1} parent=1 // pred_check_branch
      %104 = sbr.rel (0) target = $region29
    $region28: #{tpu_custom_call.1} parent=1 // pred_region
      %106 = dma.done [#allocation4], 256
    $region29: #{tpu_custom_call.1} parent=1 // pred_fallthru
      _
    %107 = vsyncpa [#allocation3], 1
    %108 = vsyncpa [#allocation6], 1
    %109 = vsyncpa [#allocation4], 1

</llo_original>
